<compile_context>
chip_gen: v6e
topology: v6e:2x2x1
jax: 0.10.0
libtpu: 0.0.40
codegen_flags: <defaults>
</compile_context>

<pallas_src>
import math

import jax
import jax.numpy as jnp
from jax import lax
from jax.experimental import pallas as pl
from jax.experimental.pallas import tpu as pltpu


def _pick_block(size, candidates):
    """Largest candidate that evenly divides `size`, else the full extent."""
    for c in candidates:
        if size % c == 0:
            return c
    return size


def _vmem_limit_bytes():
    """7/8 of the physical per-TensorCore VMEM (conservative 56 MiB fallback)."""
    try:
        cap = int(pltpu.get_tpu_info().vmem_capacity_bytes)
    except Exception:
        cap = 64 * 1024 * 1024          # assume v7x-sized VMEM if query fails
    return (cap // 8) * 7


# --------------------------------------------------------------------------
# Kernel 1: K / V projections, emitted in head-major (B, H, S, d_k) layout.
# --------------------------------------------------------------------------
def _project_kv(xk, xv, w_ref, b_ref, ko_ref, vo_ref):
    """Project (tr, D) activations into per-head (H, tr, d_k) K / V slabs."""
    num_heads, _, d_k = ko_ref.shape
    # Full-width (tr, D) x (D, D) matmuls keep the MXU filled; the per-head
    # split happens only on the (memory-bound) store path.
    yk = jnp.dot(xk, w_ref[0], preferred_element_type=jnp.float32) + b_ref[0]
    yv = jnp.dot(xv, w_ref[1], preferred_element_type=jnp.float32) + b_ref[1]
    for h in range(num_heads):
        lo = h * d_k
        ko_ref[h] = yk[:, lo:lo + d_k].astype(ko_ref.dtype)
        vo_ref[h] = yv[:, lo:lo + d_k].astype(vo_ref.dtype)


def _kv_proj_kernel(xk_ref, xv_ref, w_ref, b_ref, ko_ref, vo_ref):
    _project_kv(xk_ref[...], xv_ref[...], w_ref, b_ref, ko_ref, vo_ref)


def _kv_proj_shared_kernel(x_ref, w_ref, b_ref, ko_ref, vo_ref):
    x = x_ref[...]                       # single activation stream (k is v)
    _project_kv(x, x, w_ref, b_ref, ko_ref, vo_ref)


# --------------------------------------------------------------------------
# Kernel 2: fused Q projection + flash attention + output projection.
# Grid: (batch, q-blocks, heads, kv-blocks); heads & kv are reduction axes.
# --------------------------------------------------------------------------
def _flash_attn_kernel(xq_ref, k_ref, v_ref, wq_ref, bq_ref, wo_ref, bo_ref,
                       o_ref, q_scr, m_ref, l_ref, acc_ref):
    h = pl.program_id(2)
    kv = pl.program_id(3)
    n_kv = pl.num_programs(3)

    @pl.when(kv == 0)
    def _init():
        # Per-(q-block, head) Q projection; 1/sqrt(d_k) folded into wq / bq.
        qh = jnp.dot(xq_ref[...], wq_ref[h],
                     preferred_element_type=jnp.float32) + bq_ref[h]
        q_scr[...] = qh.astype(q_scr.dtype)
        m_ref[...] = jnp.full(m_ref.shape, -jnp.inf, m_ref.dtype)
        l_ref[...] = jnp.zeros(l_ref.shape, l_ref.dtype)
        acc_ref[...] = jnp.zeros(acc_ref.shape, acc_ref.dtype)

    qh = q_scr[...]                      # (tq, d_k)  bf16, scale pre-applied
    kh = k_ref[...]                      # (tkv, d_k) bf16
    vh = v_ref[...]                      # (tkv, d_k) bf16

    # (tq, tkv) scores in f32; contract last dims -> no materialized K^T.
    s = lax.dot_general(qh, kh, (((1,), (1,)), ((), ())),
                        preferred_element_type=jnp.float32)

    # Online softmax.  Elementwise math stays in f32 (no bf16 VPU/EUP on v5e).
    # TODO(synk): optional attention mask (mask != None) path not wired in.
    # TODO(synk): evaluate exp2 + log2(e)-folded scale (EUP relief on v6e/v7x)
    # once Mosaic exp2 lowering is confirmed on all target generations.
    m_prev = m_ref[...]
    m_new = jnp.maximum(m_prev, jnp.max(s, axis=-1, keepdims=True))
    alpha = jnp.exp(m_prev - m_new)                          # (tq, 1)
    p = jnp.exp(s - m_new)                                   # (tq, tkv) f32

    l_ref[...] = alpha * l_ref[...] + jnp.sum(p, axis=-1, keepdims=True)
    acc_ref[...] = alpha * acc_ref[...] + jnp.dot(
        p.astype(vh.dtype), vh, preferred_element_type=jnp.float32)
    m_ref[...] = m_new

    @pl.when(kv == n_kv - 1)
    def _finalize():
        # Exact reciprocal: runs once per (q-block, head) -> essentially free.
        inv = pl.reciprocal(l_ref[...], approx=False)        # (tq, 1)
        attn = (acc_ref[...] * inv).astype(wo_ref.dtype)     # (tq, d_k) bf16
        contrib = jnp.dot(attn, wo_ref[h],
                          preferred_element_type=jnp.float32)  # (tq, D) f32

        @pl.when(h == 0)
        def _first_head():
            o_ref[...] = (contrib + bo_ref[...]).astype(o_ref.dtype)

        @pl.when(h > 0)
        def _other_heads():
            o_ref[...] = o_ref[...] + contrib.astype(o_ref.dtype)


# --------------------------------------------------------------------------
# Wrapper
# --------------------------------------------------------------------------
def multi_head_attention(q, k, v, params, num_heads):
    """q: (B, Sq, D), k/v: (B, Skv, D) float32.  params store W_* like
    nn.Linear ((out, in) = (D, D)) and b_* of shape (D,).  Returns
    (B, Sq, D) float32.  mask=None path only."""
    B, Sq, D = q.shape
    assert k.shape == v.shape and k.shape[0] == B and k.shape[2] == D
    assert D % num_heads == 0
    Skv = k.shape[1]
    d_k = D // num_heads
    scale = 1.0 / math.sqrt(d_k)

    f32, bf16 = jnp.float32, jnp.bfloat16

    # --- weight prep (glue): nn.Linear stores (out, in) -> transpose to
    # (in, out); fold the 1/sqrt(d_k) score scale into the Q projection; split
    # the head axis out of the weights so the kernels never relayout heads.
    wq = (params["W_q"].astype(f32).T * scale).reshape(D, num_heads, d_k)
    wq = wq.transpose(1, 0, 2).astype(bf16)                    # (H, D, d_k)
    bq = (params["b_q"].astype(f32) * scale).reshape(num_heads, 1, d_k)

    w_kv = jnp.stack([params["W_k"].astype(f32).T,
                      params["W_v"].astype(f32).T]).astype(bf16)   # (2, D, D)
    b_kv = jnp.stack([params["b_k"].astype(f32),
                      params["b_v"].astype(f32)]).reshape(2, 1, D)  # (2,1,D) f32

    wo = params["W_o"].astype(f32).T.reshape(num_heads, d_k, D).astype(bf16)
    bo = params["b_o"].astype(f32).reshape(1, D)

    shared_kv = k is v                    # self-attention / shared K-V source
    xq = q.astype(bf16)
    xk = k.astype(bf16)
    xv = xk if shared_kv else v.astype(bf16)

    vmem_limit = _vmem_limit_bytes()
    big_vmem = vmem_limit >= 96 * 1024 * 1024     # v5e / v6e (128 MiB physical)

    # ---------------- kernel 1: K / V projections (head-major output) ----------------
    tr = _pick_block(Skv, (1024, 512, 256, 128) if big_vmem else (512, 256, 128))
    x_spec = pl.BlockSpec((None, tr, D), lambda b, r: (b, r, 0))
    kv_out_spec = pl.BlockSpec((None, num_heads, tr, d_k),
                               lambda b, r: (b, 0, r, 0))
    # TODO(synk): for very large D (>= ~2048 on v7x) the resident (2, D, D)
    # weight block should be tiled over an extra grid axis instead.
    w_spec = pl.BlockSpec((2, D, D), lambda b, r: (0, 0, 0))
    b_spec = pl.BlockSpec((2, 1, D), lambda b, r: (0, 0, 0))
    kv_out_shape = (jax.ShapeDtypeStruct((B, num_heads, Skv, d_k), bf16),
                    jax.ShapeDtypeStruct((B, num_heads, Skv, d_k), bf16))
    kv_cparams = pltpu.CompilerParams(
        dimension_semantics=("parallel", "parallel"),
        vmem_limit_bytes=vmem_limit)

    if shared_kv:
        kproj, vproj = pl.pallas_call(
            _kv_proj_shared_kernel,
            out_shape=kv_out_shape,
            grid_spec=pltpu.PrefetchScalarGridSpec(
                num_scalar_prefetch=0, grid=(B, Skv // tr),
                in_specs=[x_spec, w_spec, b_spec],
                out_specs=(kv_out_spec, kv_out_spec)),
            compiler_params=kv_cparams,
        )(xk, w_kv, b_kv)
    else:
        kproj, vproj = pl.pallas_call(
            _kv_proj_kernel,
            out_shape=kv_out_shape,
            grid_spec=pltpu.PrefetchScalarGridSpec(
                num_scalar_prefetch=0, grid=(B, Skv // tr),
                in_specs=[x_spec, x_spec, w_spec, b_spec],
                out_specs=(kv_out_spec, kv_out_spec)),
            compiler_params=kv_cparams,
        )(xk, xv, w_kv, b_kv)

    # -------- kernel 2: fused Q-proj + flash attention + output projection --------
    tq = _pick_block(Sq, (256, 128))
    tkv = _pick_block(Skv, (1024, 512, 256, 128) if big_vmem else (512, 256, 128))
    n_q = Sq // tq
    n_kv = Skv // tkv

    out = pl.pallas_call(
        _flash_attn_kernel,
        out_shape=jax.ShapeDtypeStruct((B, Sq, D), f32),
        grid_spec=pltpu.PrefetchScalarGridSpec(
            num_scalar_prefetch=0,
            grid=(B, n_q, num_heads, n_kv),
            in_specs=[
                pl.BlockSpec((None, tq, D), lambda b, qi, h, ki: (b, qi, 0)),
                pl.BlockSpec((None, None, tkv, d_k),
                             lambda b, qi, h, ki: (b, h, ki, 0)),
                pl.BlockSpec((None, None, tkv, d_k),
                             lambda b, qi, h, ki: (b, h, ki, 0)),
                # Resident per-head weights / biases (DMA'd once).
                # TODO(synk): tile/stream these for very large D on v7x.
                pl.BlockSpec((num_heads, D, d_k), lambda b, qi, h, ki: (0, 0, 0)),
                pl.BlockSpec((num_heads, 1, d_k), lambda b, qi, h, ki: (0, 0, 0)),
                pl.BlockSpec((num_heads, d_k, D), lambda b, qi, h, ki: (0, 0, 0)),
                pl.BlockSpec((1, D), lambda b, qi, h, ki: (0, 0)),
            ],
            out_specs=pl.BlockSpec((None, tq, D), lambda b, qi, h, ki: (b, qi, 0)),
            scratch_shapes=[
                pltpu.VMEM((tq, d_k), bf16),   # projected Q (current head)
                pltpu.VMEM((tq, 1), f32),      # running max
                pltpu.VMEM((tq, 1), f32),      # running sum
                pltpu.VMEM((tq, d_k), f32),    # attention accumulator
            ]),
        compiler_params=pltpu.CompilerParams(
            dimension_semantics=("parallel", "parallel", "arbitrary", "arbitrary"),
            vmem_limit_bytes=vmem_limit),
    )(xq, kproj, vproj, wq, bq, wo, bo)
    return out


def _reference_mha(q, k, v, params, num_heads):
    """Pure-JAX (f32) reference mirroring the PyTorch module."""
    B, Sq, D = q.shape
    Skv = k.shape[1]
    d_k = D // num_heads

    def linear(x, w, b):
        return x @ w.T + b

    def split(x, s):  # (B, S, D) -> (B, H, S, d_k)
        return x.reshape(B, s, num_heads, d_k).transpose(0, 2, 1, 3)

    Q = split(linear(q, params["W_q"], params["b_q"]), Sq)
    K = split(linear(k, params["W_k"], params["b_k"]), Skv)
    V = split(linear(v, params["W_v"], params["b_v"]), Skv)

    scores = jnp.einsum("bhqd,bhkd->bhqk", Q, K) / math.sqrt(d_k)
    probs = jax.nn.softmax(scores, axis=-1)
    attn = jnp.einsum("bhqk,bhkd->bhqd", probs, V)
    attn = attn.transpose(0, 2, 1, 3).reshape(B, Sq, D)
    return linear(attn, params["W_o"], params["b_o"])


if __name__ == "__main__":
    batch, seq, d_model, num_heads = 2, 8, 32, 4

    key = jax.random.PRNGKey(0)
    keys = jax.random.split(key, 11)

    # Deterministic parameter init (shapes match nn.Linear(d_model, d_model)).
    bound = 1.0 / math.sqrt(d_model)
    params = {
        "W_q": jax.random.uniform(keys[0], (d_model, d_model), jnp.float32, -bound, bound),
        "b_q": jax.random.uniform(keys[1], (d_model,), jnp.float32, -bound, bound),
        "W_k": jax.random.uniform(keys[2], (d_model, d_model), jnp.float32, -bound, bound),
        "b_k": jax.random.uniform(keys[3], (d_model,), jnp.float32, -bound, bound),
        "W_v": jax.random.uniform(keys[4], (d_model, d_model), jnp.float32, -bound, bound),
        "b_v": jax.random.uniform(keys[5], (d_model,), jnp.float32, -bound, bound),
        "W_o": jax.random.uniform(keys[6], (d_model, d_model), jnp.float32, -bound, bound),
        "b_o": jax.random.uniform(keys[7], (d_model,), jnp.float32, -bound, bound),
    }

    q = jax.random.normal(keys[8], (batch, seq, d_model), jnp.float32)
    k = jax.random.normal(keys[9], (batch, seq, d_model), jnp.float32)
    v = jax.random.normal(keys[10], (batch, seq, d_model), jnp.float32)

    # Cross-attention-style call (distinct q / k / v tensors).
    out = jax.block_until_ready(multi_head_attention(q, k, v, params, num_heads))
    ref = _reference_mha(q, k, v, params, num_heads)
    assert out.shape == (batch, seq, d_model)
    assert out.dtype == jnp.float32
    # bf16 MXU operands -> relaxed tolerance vs f32 reference.
    assert jnp.allclose(out, ref, atol=5e-2, rtol=5e-2), "mismatch vs JAX reference"

    # Self-attention call exercises the shared K/V fast path (k is v).
    out_self = jax.block_until_ready(multi_head_attention(q, q, q, params, num_heads))
    ref_self = _reference_mha(q, q, q, params, num_heads)
    assert jnp.allclose(out_self, ref_self, atol=5e-2, rtol=5e-2), \
        "mismatch vs JAX reference (self-attention path)"

    print("KERNEL_OK")
</pallas_src>

<mosaic_0001>
module attributes {stable_mosaic.version = 11 : i64} {
  func.func @_kv_proj_kernel(%arg0: i32, %arg1: i32, %arg2: memref<1x8x32xbf16, #tpu.memory_space<vmem>>, %arg3: memref<1x8x32xbf16, #tpu.memory_space<vmem>>, %arg4: memref<2x32x32xbf16, #tpu.memory_space<vmem>>, %arg5: memref<2x1x32xf32, #tpu.memory_space<vmem>>, %arg6: memref<1x4x8x8xbf16, #tpu.memory_space<vmem>>, %arg7: memref<1x4x8x8xbf16, #tpu.memory_space<vmem>>) attributes {dimension_semantics = [#tpu.dimension_semantics<parallel>, #tpu.dimension_semantics<parallel>], iteration_bounds = array<i64: 2, 1>, scalar_prefetch = 0 : i64, scratch_operands = 0 : i64, tpu.core_type = #tpu.core_type<tc>, window_params = [{transform_indices = @transform_0, window_bounds = array<i64: 1, 8, 32>}, {transform_indices = @transform_1, window_bounds = array<i64: 1, 8, 32>}, {pipeline_mode = #tpu.pipeline_mode<synchronous>, transform_indices = @transform_2, window_bounds = array<i64: 2, 32, 32>}, {pipeline_mode = #tpu.pipeline_mode<synchronous>, transform_indices = @transform_3, window_bounds = array<i64: 2, 1, 32>}, {transform_indices = @transform_4, window_bounds = array<i64: 1, 4, 8, 8>}, {transform_indices = @transform_5, window_bounds = array<i64: 1, 4, 8, 8>}]} {
    %c0 = arith.constant 0 : index
    %c0_0 = arith.constant 0 : index
    %c0_1 = arith.constant 0 : index
    %0 = vector.load %arg2[%c0, %c0_0, %c0_1] : memref<1x8x32xbf16, #tpu.memory_space<vmem>>, vector<1x8x32xbf16>
    %1 = vector.shape_cast %0 : vector<1x8x32xbf16> to vector<8x32xbf16>
    %c0_2 = arith.constant 0 : index
    %c0_3 = arith.constant 0 : index
    %c0_4 = arith.constant 0 : index
    %2 = vector.load %arg3[%c0_2, %c0_3, %c0_4] : memref<1x8x32xbf16, #tpu.memory_space<vmem>>, vector<1x8x32xbf16>
    %3 = vector.shape_cast %2 : vector<1x8x32xbf16> to vector<8x32xbf16>
    %c0_5 = arith.constant 0 : index
    %c0_6 = arith.constant 0 : index
    %c0_7 = arith.constant 0 : index
    %4 = vector.load %arg4[%c0_5, %c0_6, %c0_7] : memref<2x32x32xbf16, #tpu.memory_space<vmem>>, vector<1x32x32xbf16>
    %5 = vector.shape_cast %4 : vector<1x32x32xbf16> to vector<32x32xbf16>
    %cst = arith.constant dense<0.000000e+00> : vector<8x32xf32>
    %6 = tpu.matmul %1, %5, %cst {dimension_numbers = #tpu.dot_dimension_numbers<[1], [0], [0], [1], [0, 0, 1, 1], [], []>} : vector<8x32xbf16>, vector<32x32xbf16>, vector<8x32xf32> -> vector<8x32xf32>
    %c0_8 = arith.constant 0 : index
    %c0_9 = arith.constant 0 : index
    %c0_10 = arith.constant 0 : index
    %7 = vector.load %arg5[%c0_8, %c0_9, %c0_10] : memref<2x1x32xf32, #tpu.memory_space<vmem>>, vector<1x1x32xf32>
    %8 = vector.shape_cast %7 : vector<1x1x32xf32> to vector<1x32xf32>
    %9 = vector.broadcast %8 : vector<1x32xf32> to vector<8x32xf32>
    %10 = arith.addf %6, %9 : vector<8x32xf32>
    %c1 = arith.constant 1 : index
    %c0_11 = arith.constant 0 : index
    %c0_12 = arith.constant 0 : index
    %11 = vector.load %arg4[%c1, %c0_11, %c0_12] : memref<2x32x32xbf16, #tpu.memory_space<vmem>>, vector<1x32x32xbf16>
    %12 = vector.shape_cast %11 : vector<1x32x32xbf16> to vector<32x32xbf16>
    %cst_13 = arith.constant dense<0.000000e+00> : vector<8x32xf32>
    %13 = tpu.matmul %3, %12, %cst_13 {dimension_numbers = #tpu.dot_dimension_numbers<[1], [0], [0], [1], [0, 0, 1, 1], [], []>} : vector<8x32xbf16>, vector<32x32xbf16>, vector<8x32xf32> -> vector<8x32xf32>
    %c1_14 = arith.constant 1 : index
    %c0_15 = arith.constant 0 : index
    %c0_16 = arith.constant 0 : index
    %14 = vector.load %arg5[%c1_14, %c0_15, %c0_16] : memref<2x1x32xf32, #tpu.memory_space<vmem>>, vector<1x1x32xf32>
    %15 = vector.shape_cast %14 : vector<1x1x32xf32> to vector<1x32xf32>
    %16 = vector.broadcast %15 : vector<1x32xf32> to vector<8x32xf32>
    %17 = arith.addf %13, %16 : vector<8x32xf32>
    %18 = vector.extract_strided_slice %10 {offsets = [0, 0], sizes = [8, 8], strides = [1, 1]} : vector<8x32xf32> to vector<8x8xf32>
    %19 = arith.truncf %18 : vector<8x8xf32> to vector<8x8xbf16>
    %c0_17 = arith.constant 0 : index
    %c0_18 = arith.constant 0 : index
    %c0_19 = arith.constant 0 : index
    %c0_20 = arith.constant 0 : index
    %20 = vector.load %arg6[%c0_17, %c0_18, %c0_19, %c0_20] : memref<1x4x8x8xbf16, #tpu.memory_space<vmem>>, vector<1x1x8x8xbf16>
    %21 = vector.shape_cast %20 : vector<1x1x8x8xbf16> to vector<8x8xbf16>
    %22 = vector.shape_cast %19 : vector<8x8xbf16> to vector<1x1x8x8xbf16>
    tpu.vector_store %arg6[%c0_17, %c0_18, %c0_19, %c0_20], %22 {strides = array<i32>} : memref<1x4x8x8xbf16, #tpu.memory_space<vmem>>, vector<1x1x8x8xbf16>,
    %23 = vector.extract_strided_slice %17 {offsets = [0, 0], sizes = [8, 8], strides = [1, 1]} : vector<8x32xf32> to vector<8x8xf32>
    %24 = arith.truncf %23 : vector<8x8xf32> to vector<8x8xbf16>
    %c0_21 = arith.constant 0 : index
    %c0_22 = arith.constant 0 : index
    %c0_23 = arith.constant 0 : index
    %c0_24 = arith.constant 0 : index
    %25 = vector.load %arg7[%c0_21, %c0_22, %c0_23, %c0_24] : memref<1x4x8x8xbf16, #tpu.memory_space<vmem>>, vector<1x1x8x8xbf16>
    %26 = vector.shape_cast %25 : vector<1x1x8x8xbf16> to vector<8x8xbf16>
    %27 = vector.shape_cast %24 : vector<8x8xbf16> to vector<1x1x8x8xbf16>
    tpu.vector_store %arg7[%c0_21, %c0_22, %c0_23, %c0_24], %27 {strides = array<i32>} : memref<1x4x8x8xbf16, #tpu.memory_space<vmem>>, vector<1x1x8x8xbf16>,
    %28 = vector.extract_strided_slice %10 {offsets = [0, 8], sizes = [8, 8], strides = [1, 1]} : vector<8x32xf32> to vector<8x8xf32>
    %29 = arith.truncf %28 : vector<8x8xf32> to vector<8x8xbf16>
    %c0_25 = arith.constant 0 : index
    %c1_26 = arith.constant 1 : index
    %c0_27 = arith.constant 0 : index
    %c0_28 = arith.constant 0 : index
    %30 = vector.load %arg6[%c0_25, %c1_26, %c0_27, %c0_28] : memref<1x4x8x8xbf16, #tpu.memory_space<vmem>>, vector<1x1x8x8xbf16>
    %31 = vector.shape_cast %30 : vector<1x1x8x8xbf16> to vector<8x8xbf16>
    %32 = vector.shape_cast %29 : vector<8x8xbf16> to vector<1x1x8x8xbf16>
    tpu.vector_store %arg6[%c0_25, %c1_26, %c0_27, %c0_28], %32 {strides = array<i32>} : memref<1x4x8x8xbf16, #tpu.memory_space<vmem>>, vector<1x1x8x8xbf16>,
    %33 = vector.extract_strided_slice %17 {offsets = [0, 8], sizes = [8, 8], strides = [1, 1]} : vector<8x32xf32> to vector<8x8xf32>
    %34 = arith.truncf %33 : vector<8x8xf32> to vector<8x8xbf16>
    %c0_29 = arith.constant 0 : index
    %c1_30 = arith.constant 1 : index
    %c0_31 = arith.constant 0 : index
    %c0_32 = arith.constant 0 : index
    %35 = vector.load %arg7[%c0_29, %c1_30, %c0_31, %c0_32] : memref<1x4x8x8xbf16, #tpu.memory_space<vmem>>, vector<1x1x8x8xbf16>
    %36 = vector.shape_cast %35 : vector<1x1x8x8xbf16> to vector<8x8xbf16>
    %37 = vector.shape_cast %34 : vector<8x8xbf16> to vector<1x1x8x8xbf16>
    tpu.vector_store %arg7[%c0_29, %c1_30, %c0_31, %c0_32], %37 {strides = array<i32>} : memref<1x4x8x8xbf16, #tpu.memory_space<vmem>>, vector<1x1x8x8xbf16>,
    %38 = vector.extract_strided_slice %10 {offsets = [0, 16], sizes = [8, 8], strides = [1, 1]} : vector<8x32xf32> to vector<8x8xf32>
    %39 = arith.truncf %38 : vector<8x8xf32> to vector<8x8xbf16>
    %c0_33 = arith.constant 0 : index
    %c2 = arith.constant 2 : index
    %c0_34 = arith.constant 0 : index
    %c0_35 = arith.constant 0 : index
    %40 = vector.load %arg6[%c0_33, %c2, %c0_34, %c0_35] : memref<1x4x8x8xbf16, #tpu.memory_space<vmem>>, vector<1x1x8x8xbf16>
    %41 = vector.shape_cast %40 : vector<1x1x8x8xbf16> to vector<8x8xbf16>
    %42 = vector.shape_cast %39 : vector<8x8xbf16> to vector<1x1x8x8xbf16>
    tpu.vector_store %arg6[%c0_33, %c2, %c0_34, %c0_35], %42 {strides = array<i32>} : memref<1x4x8x8xbf16, #tpu.memory_space<vmem>>, vector<1x1x8x8xbf16>,
    %43 = vector.extract_strided_slice %17 {offsets = [0, 16], sizes = [8, 8], strides = [1, 1]} : vector<8x32xf32> to vector<8x8xf32>
    %44 = arith.truncf %43 : vector<8x8xf32> to vector<8x8xbf16>
    %c0_36 = arith.constant 0 : index
    %c2_37 = arith.constant 2 : index
    %c0_38 = arith.constant 0 : index
    %c0_39 = arith.constant 0 : index
    %45 = vector.load %arg7[%c0_36, %c2_37, %c0_38, %c0_39] : memref<1x4x8x8xbf16, #tpu.memory_space<vmem>>, vector<1x1x8x8xbf16>
    %46 = vector.shape_cast %45 : vector<1x1x8x8xbf16> to vector<8x8xbf16>
    %47 = vector.shape_cast %44 : vector<8x8xbf16> to vector<1x1x8x8xbf16>
    tpu.vector_store %arg7[%c0_36, %c2_37, %c0_38, %c0_39], %47 {strides = array<i32>} : memref<1x4x8x8xbf16, #tpu.memory_space<vmem>>, vector<1x1x8x8xbf16>,
    %48 = vector.extract_strided_slice %10 {offsets = [0, 24], sizes = [8, 8], strides = [1, 1]} : vector<8x32xf32> to vector<8x8xf32>
    %49 = arith.truncf %48 : vector<8x8xf32> to vector<8x8xbf16>
    %c0_40 = arith.constant 0 : index
    %c3 = arith.constant 3 : index
    %c0_41 = arith.constant 0 : index
    %c0_42 = arith.constant 0 : index
    %50 = vector.load %arg6[%c0_40, %c3, %c0_41, %c0_42] : memref<1x4x8x8xbf16, #tpu.memory_space<vmem>>, vector<1x1x8x8xbf16>
    %51 = vector.shape_cast %50 : vector<1x1x8x8xbf16> to vector<8x8xbf16>
    %52 = vector.shape_cast %49 : vector<8x8xbf16> to vector<1x1x8x8xbf16>
    tpu.vector_store %arg6[%c0_40, %c3, %c0_41, %c0_42], %52 {strides = array<i32>} : memref<1x4x8x8xbf16, #tpu.memory_space<vmem>>, vector<1x1x8x8xbf16>,
    %53 = vector.extract_strided_slice %17 {offsets = [0, 24], sizes = [8, 8], strides = [1, 1]} : vector<8x32xf32> to vector<8x8xf32>
    %54 = arith.truncf %53 : vector<8x8xf32> to vector<8x8xbf16>
    %c0_43 = arith.constant 0 : index
    %c3_44 = arith.constant 3 : index
    %c0_45 = arith.constant 0 : index
    %c0_46 = arith.constant 0 : index
    %55 = vector.load %arg7[%c0_43, %c3_44, %c0_45, %c0_46] : memref<1x4x8x8xbf16, #tpu.memory_space<vmem>>, vector<1x1x8x8xbf16>
    %56 = vector.shape_cast %55 : vector<1x1x8x8xbf16> to vector<8x8xbf16>
    %57 = vector.shape_cast %54 : vector<8x8xbf16> to vector<1x1x8x8xbf16>
    tpu.vector_store %arg7[%c0_43, %c3_44, %c0_45, %c0_46], %57 {strides = array<i32>} : memref<1x4x8x8xbf16, #tpu.memory_space<vmem>>, vector<1x1x8x8xbf16>,
    return
  }
  func.func @transform_0(%arg0: i32, %arg1: i32) -> (i32, i32, i32) {
    %c0_i32 = arith.constant 0 : i32
    %c0_i32_0 = arith.constant 0 : i32
    return %arg0, %arg1, %c0_i32 : i32, i32, i32
  }
  func.func @transform_1(%arg0: i32, %arg1: i32) -> (i32, i32, i32) {
    %c0_i32 = arith.constant 0 : i32
    %c0_i32_0 = arith.constant 0 : i32
    return %arg0, %arg1, %c0_i32 : i32, i32, i32
  }
  func.func @transform_2(%arg0: i32, %arg1: i32) -> (i32, i32, i32) {
    %c0_i32 = arith.constant 0 : i32
    %c0_i32_0 = arith.constant 0 : i32
    %c0_i32_1 = arith.constant 0 : i32
    %c0_i32_2 = arith.constant 0 : i32
    return %c0_i32, %c0_i32_0, %c0_i32_1 : i32, i32, i32
  }
  func.func @transform_3(%arg0: i32, %arg1: i32) -> (i32, i32, i32) {
    %c0_i32 = arith.constant 0 : i32
    %c0_i32_0 = arith.constant 0 : i32
    %c0_i32_1 = arith.constant 0 : i32
    %c0_i32_2 = arith.constant 0 : i32
    return %c0_i32, %c0_i32_0, %c0_i32_1 : i32, i32, i32
  }
  func.func @transform_4(%arg0: i32, %arg1: i32) -> (i32, i32, i32, i32) {
    %c0_i32 = arith.constant 0 : i32
    %c0_i32_0 = arith.constant 0 : i32
    %c0_i32_1 = arith.constant 0 : i32
    return %arg0, %c0_i32, %arg1, %c0_i32_0 : i32, i32, i32, i32
  }
  func.func @transform_5(%arg0: i32, %arg1: i32) -> (i32, i32, i32, i32) {
    %c0_i32 = arith.constant 0 : i32
    %c0_i32_0 = arith.constant 0 : i32
    %c0_i32_1 = arith.constant 0 : i32
    return %arg0, %c0_i32, %arg1, %c0_i32_0 : i32, i32, i32, i32
  }
}

</mosaic_0001>

<llo_original>
// kernel: tpu_custom_call.1
$region0: #{tpu_custom_call.1}
  #allocation0 [shape = 'u32[]', space=smem, size = 0x4, offset = 0x4, fixed_abs, tag = 'smem constant byte address 0x4 - core index']
  #allocation1 [shape = 'u32[144,128]{1,0:T(1,128)}', space=vmem, size = 0x12000, scoped, tag = 'internal scratch']
  %s0 = inlined_call_operand.hbm [shape: bf16[2,8,32], index: 0, kind: input, shape index: {}]
  %s1 = inlined_call_operand.hbm [shape: bf16[2,8,32], index: 1, kind: input, shape index: {}]
  %s2 = inlined_call_operand.hbm [shape: bf16[2,32,32], index: 2, kind: input, shape index: {}]
  %s3 = inlined_call_operand.vmem [shape: f32[2,1,32], index: 3, kind: input, shape index: {}]
  %s4 = inlined_call_operand.hbm [shape: bf16[2,4,8,8], index: 4, kind: output, shape index: {0}]
  %s5 = inlined_call_operand.hbm [shape: bf16[2,4,8,8], index: 5, kind: output, shape index: {1}]
  %6 = xla_tuple %s4, %s5
  %s7 = sld [smem:[#allocation0]]
  $region69: #{tpu_custom_call.1} parent=0
    _
  %s9 = ssub.s32 1, %s7
  %s10 = scalar_select 0, %s9, %s7
  $region1: #{tpu_custom_call.1} parent=0
    #allocation2 [shape = 'u8[4096]{0}', space=vmem, size = 0x1000, scoped, tag = 'input window, operand 0']
    #allocation3 [shape = 's32[2]{0}', space=sflag, size = 0x8, scoped, tag = 'scoped memory for tpu_custom_call.1']
    #allocation4 [shape = 's32[2]{0}', space=sflag, size = 0x8, scoped, tag = 'scoped memory for tpu_custom_call.1']
    #allocation5 [shape = 'u8[4096]{0}', space=vmem, size = 0x1000, scoped, tag = 'input window, operand 1']
    #allocation6 [shape = 's32[2]{0}', space=sflag, size = 0x8, scoped, tag = 'scoped memory for tpu_custom_call.1']
    #allocation7 [shape = 'u8[16384]{0}', space=vmem, size = 0x4000, scoped, tag = 'input window, operand 2, single buffered']
    #allocation8 [shape = 'u8[16384]{0}', space=vmem, size = 0x4000, scoped, tag = 'output window, operand 0']
    #allocation9 [shape = 'u8[16384]{0}', space=vmem, size = 0x4000, scoped, tag = 'output window, operand 1']
    #allocation10 [shape = 's32[2]{0}', space=sflag, size = 0x8, scoped, tag = 'scoped memory for tpu_custom_call.1']
    %11 = vsyncpa [#allocation3], 0
    %s12 = scalar_lea.sflag [#allocation3], 1
    %13 = vsyncpa %s12, 0
    %14 = vsyncpa [#allocation6], 0
    %s15 = scalar_lea.sflag [#allocation6], 1
    %16 = vsyncpa %s15, 0
    %17 = vsyncpa [#allocation4], 0
    %s18 = scalar_lea.sflag [#allocation4], 1
    %19 = vsyncpa %s18, 0
    %20 = vsyncpa [#allocation10], 0
    %s21 = scalar_lea.sflag [#allocation10], 1
    %22 = vsyncpa %s21, 0
    loop: start=0, step=1, limit=4
    $region2: #{tpu_custom_call.1} parent=1 // loop_pre_header
      _
    $region3: #{tpu_custom_call.1} parent=1 // loop_header
      %s24 = sphi 0, %s28
      %p25 = scmp.ge.s32.totalorder %s24, 4
      %s31 = sphi 0, %s43
      %s32 = sphi 0, %s39
      %s33 = sphi 0, %s31
      %s34 = sphi 0, %s32
      %s35 = sphi 0, %s33
      %s36 = sphi 0, %s34
      %s48 = sphi 0, %s50
      %s51 = sphi 0, %s48
      %s52 = sphi 0, %s51
      %s68 = sphi 0, %s52
      %s76 = sphi 0, %s78
      %s79 = sphi 0, %s76
      %s80 = sphi 0, %s79
      %s96 = sphi 0, %s80
      %s100 = sphi 0, %s100
      %s102 = sphi 0, %s100
      %s103 = sphi 0, %s102
      %s117 = sphi 0, %s103
      %s121 = sphi 0, %s121
      %s123 = sphi 0, %s121
      %s124 = sphi 0, %s123
      %s138 = sphi 0, %s124
      %s146 = sphi 0, %s148
      %s149 = sphi 0, %s146
      %s150 = sphi 0, %s149
      %s166 = sphi 0, %s150
      %s174 = sphi 0, %s176
      %s177 = sphi 0, %s174
      %s178 = sphi 0, %s177
      %s194 = sphi 0, %s178
    $region4: #{tpu_custom_call.1} parent=1 // loop_header_branch
      %27 = sbr.rel (%p25) target = $region8
    $region5: #{tpu_custom_call.1} parent=1 // loop_body
      %s29 = ssub.s32 %s24, 1
      %s30 = ssub.s32 %s24, 2
      %s37 = sadd.s32 1, %s32
      %p38 = scmp.ge.s32.totalorder %s37, 1
      %s39 = scalar_select %p38, 0, %s37
      %s40 = sadd.s32 1, %s31
      %s41 = scalar_select %p38, %s40, %s31
      %p42 = scmp.ge.s32.totalorder %s41, 2
      %s43 = scalar_select %p42, 0, %s41
      %s44 = ssub.s32 %s31, %s43
      %s45 = ssub.s32 %s32, %s39
      %s46 = sor.u32 %s44, %s45
      %p47 = scmp.eq.s32.totalorder %s46, 0
      %s49 = sadd.s32 %s48, 1
      %s50 = scalar_select %p47, %s48, %s49
      %p53 = pneg %p47
      %p54 = scmp.eq.s32.totalorder %s24, 1
      %p55 = por %p53, %p54
      %p56 = scmp.ne.s32.totalorder %s48, %s51
      %p57 = scmp.eq.s32.totalorder %s24, 0
      %p58 = por %p56, %p57
      %p59 = scmp.ne.s32.totalorder %s48, %s51
      %p60 = scmp.eq.s32.totalorder %s29, 1
      %p61 = por %p59, %p60
      %p62 = scmp.ne.s32.totalorder %s51, %s52
      %p63 = scmp.eq.s32.totalorder %s29, 0
      %p64 = por %p62, %p63
      %p65 = scmp.ne.s32.totalorder %s51, %s52
      %p66 = scmp.eq.s32.totalorder %s30, 1
      %p67 = por %p65, %p66
      %p69 = scmp.ne.s32.totalorder %s52, %s68
      %p70 = scmp.eq.s32.totalorder %s30, 0
      %p71 = por %p69, %p70
      %s72 = ssub.s32 %s31, %s43
      %s73 = ssub.s32 %s32, %s39
      %s74 = sor.u32 %s72, %s73
      %p75 = scmp.eq.s32.totalorder %s74, 0
      %s77 = sadd.s32 %s76, 1
      %s78 = scalar_select %p75, %s76, %s77
      %p81 = pneg %p75
      %p82 = scmp.eq.s32.totalorder %s24, 1
      %p83 = por %p81, %p82
      %p84 = scmp.ne.s32.totalorder %s76, %s79
      %p85 = scmp.eq.s32.totalorder %s24, 0
      %p86 = por %p84, %p85
      %p87 = scmp.ne.s32.totalorder %s76, %s79
      %p88 = scmp.eq.s32.totalorder %s29, 1
      %p89 = por %p87, %p88
      %p90 = scmp.ne.s32.totalorder %s79, %s80
      %p91 = scmp.eq.s32.totalorder %s29, 0
      %p92 = por %p90, %p91
      %p93 = scmp.ne.s32.totalorder %s79, %s80
      %p94 = scmp.eq.s32.totalorder %s30, 1
      %p95 = por %p93, %p94
      %p97 = scmp.ne.s32.totalorder %s80, %s96
      %p98 = scmp.eq.s32.totalorder %s30, 0
      %p99 = por %p97, %p98
      %s101 = sadd.s32 %s100, 1
      %p104 = scmp.eq.s32.totalorder %s24, 1
      %p105 = scmp.ne.s32.totalorder %s100, %s102
      %p106 = scmp.eq.s32.totalorder %s24, 0
      %p107 = por %p105, %p106
      %p108 = scmp.ne.s32.totalorder %s100, %s102
      %p109 = scmp.eq.s32.totalorder %s29, 1
      %p110 = por %p108, %p109
      %p111 = scmp.ne.s32.totalorder %s102, %s103
      %p112 = scmp.eq.s32.totalorder %s29, 0
      %p113 = por %p111, %p112
      %p114 = scmp.ne.s32.totalorder %s102, %s103
      %p115 = scmp.eq.s32.totalorder %s30, 1
      %p116 = por %p114, %p115
      %p118 = scmp.ne.s32.totalorder %s103, %s117
      %p119 = scmp.eq.s32.totalorder %s30, 0
      %p120 = por %p118, %p119
      %s122 = sadd.s32 %s121, 1
      %p125 = scmp.eq.s32.totalorder %s24, 1
      %p126 = scmp.ne.s32.totalorder %s121, %s123
      %p127 = scmp.eq.s32.totalorder %s24, 0
      %p128 = por %p126, %p127
      %p129 = scmp.ne.s32.totalorder %s121, %s123
      %p130 = scmp.eq.s32.totalorder %s29, 1
      %p131 = por %p129, %p130
      %p132 = scmp.ne.s32.totalorder %s123, %s124
      %p133 = scmp.eq.s32.totalorder %s29, 0
      %p134 = por %p132, %p133
      %p135 = scmp.ne.s32.totalorder %s123, %s124
      %p136 = scmp.eq.s32.totalorder %s30, 1
      %p137 = por %p135, %p136
      %p139 = scmp.ne.s32.totalorder %s124, %s138
      %p140 = scmp.eq.s32.totalorder %s30, 0
      %p141 = por %p139, %p140
      %s142 = ssub.s32 %s31, %s43
      %s143 = ssub.s32 %s32, %s39
      %s144 = sor.u32 %s142, %s143
      %p145 = scmp.eq.s32.totalorder %s144, 0
      %s147 = sadd.s32 %s146, 1
      %s148 = scalar_select %p145, %s146, %s147
      %p151 = pneg %p145
      %p152 = scmp.eq.s32.totalorder %s24, 1
      %p153 = por %p151, %p152
      %p154 = scmp.ne.s32.totalorder %s146, %s149
      %p155 = scmp.eq.s32.totalorder %s24, 0
      %p156 = por %p154, %p155
      %p157 = scmp.ne.s32.totalorder %s146, %s149
      %p158 = scmp.eq.s32.totalorder %s29, 1
      %p159 = por %p157, %p158
      %p160 = scmp.ne.s32.totalorder %s149, %s150
      %p161 = scmp.eq.s32.totalorder %s29, 0
      %p162 = por %p160, %p161
      %p163 = scmp.ne.s32.totalorder %s149, %s150
      %p164 = scmp.eq.s32.totalorder %s30, 1
      %p165 = por %p163, %p164
      %p167 = scmp.ne.s32.totalorder %s150, %s166
      %p168 = scmp.eq.s32.totalorder %s30, 0
      %p169 = por %p167, %p168
      %s170 = ssub.s32 %s31, %s43
      %s171 = ssub.s32 %s32, %s39
      %s172 = sor.u32 %s170, %s171
      %p173 = scmp.eq.s32.totalorder %s172, 0
      %s175 = sadd.s32 %s174, 1
      %s176 = scalar_select %p173, %s174, %s175
      %p179 = pneg %p173
      %p180 = scmp.eq.s32.totalorder %s24, 1
      %p181 = por %p179, %p180
      %p182 = scmp.ne.s32.totalorder %s174, %s177
      %p183 = scmp.eq.s32.totalorder %s24, 0
      %p184 = por %p182, %p183
      %p185 = scmp.ne.s32.totalorder %s174, %s177
      %p186 = scmp.eq.s32.totalorder %s29, 1
      %p187 = por %p185, %p186
      %p188 = scmp.ne.s32.totalorder %s177, %s178
      %p189 = scmp.eq.s32.totalorder %s29, 0
      %p190 = por %p188, %p189
      %p191 = scmp.ne.s32.totalorder %s177, %s178
      %p192 = scmp.eq.s32.totalorder %s30, 1
      %p193 = por %p191, %p192
      %p195 = scmp.ne.s32.totalorder %s178, %s194
      %p196 = scmp.eq.s32.totalorder %s30, 0
      %p197 = por %p195, %p196
      %p198 = scmp.le.s32.totalorder 1, %s24
      %p199 = scmp.lt.s32.totalorder %s24, 3
      %p200 = pnand %p198, %p199
      %p201 = pneg %p200
      // Predicated region
      $region9: #{tpu_custom_call.1} parent=5 // pred_check
        _
      $region10: #{tpu_custom_call.1} parent=5 // pred_check_branch
        %203 = sbr.rel (%p200) target = $region12
      $region11: #{tpu_custom_call.1} parent=5 // pred_region
        %s204 = ssub.s32 %s24, 1
        // Predicated region
        $region13: #{tpu_custom_call.1} parent=11 // pred_check
          %p205 = pneg %p113
        $region14: #{tpu_custom_call.1} parent=11 // pred_check_branch
          %207 = sbr.rel (%p205) target = $region16
        $region15: #{tpu_custom_call.1} parent=11 // pred_region
          %s209 = ssub.s32 512, 512
          %210 = vsyncadd [#allocation6], %s209
          %s211 = sshll.u32 [#allocation7], 4
          %s212 = int_to_ptr.vmem [resolvable:$true] %s211
          %217 = dma.hbm_to_vmem [thread:$0]  %s2, 512, %s212, [#allocation6], 64, 64, 4
        $region16: #{tpu_custom_call.1} parent=11 // pred_fallthru
          _
        // Predicated region
        $region17: #{tpu_custom_call.1} parent=11 // pred_check
          %p218 = pneg %p134
        $region18: #{tpu_custom_call.1} parent=11 // pred_check_branch
          %220 = sbr.rel (%p218) target = $region20
        $region19: #{tpu_custom_call.1} parent=11 // pred_region
          _
        $region20: #{tpu_custom_call.1} parent=11 // pred_fallthru
          _
      $region12: #{tpu_custom_call.1} parent=5 // pred_fallthru
        _
      %p221 = scmp.lt.s32.totalorder %s24, 2
      // Predicated region
      $region21: #{tpu_custom_call.1} parent=5 // pred_check
        %p222 = pneg %p221
      $region22: #{tpu_custom_call.1} parent=5 // pred_check_branch
        %224 = sbr.rel (%p222) target = $region24
      $region23: #{tpu_custom_call.1} parent=5 // pred_region
        // Predicated region
        $region25: #{tpu_custom_call.1} parent=23 // pred_check
          %p225 = pneg %p58
        $region26: #{tpu_custom_call.1} parent=23 // pred_check_branch
          %227 = sbr.rel (%p225) target = $region28
        $region27: #{tpu_custom_call.1} parent=23 // pred_region
          %s228 = sand.u32 %s48, 1
          %s229 = scalar_lea.sflag [#allocation3], %s228
          %s230 = sand.u32 %s48, 1
          %s231 = smul.addr %s230, 4
          %s232 = scalar_lea.vmem [#allocation2], %s231
          %s234 = ssub.s32 64, 64
          %235 = vsyncadd %s229, %s234
          %s236 = sadd.s32 %s32, %s31
          %s237 = smul.addr %s236, 64
          %s238 = scalar_lea.hbm %s0, %s237
          %s240 = sshll.u32 %s232, 4
          %s241 = int_to_ptr.vmem [resolvable:$true] %s240
          %243 = dma.hbm_to_vmem [thread:$0]  %s238, 64, %s241, %s229
        $region28: #{tpu_custom_call.1} parent=23 // pred_fallthru
          _
        // Predicated region
        $region29: #{tpu_custom_call.1} parent=23 // pred_check
          %p244 = pneg %p86
        $region30: #{tpu_custom_call.1} parent=23 // pred_check_branch
          %246 = sbr.rel (%p244) target = $region32
        $region31: #{tpu_custom_call.1} parent=23 // pred_region
          %s247 = sand.u32 %s24, 1
          %s248 = scalar_lea.sflag [#allocation6], %s247
          %s249 = sand.u32 %s76, 1
          %s250 = smul.addr %s249, 4
          %s251 = scalar_lea.vmem [#allocation5], %s250
          %s253 = ssub.s32 64, 64
          %254 = vsyncadd %s248, %s253
          %s255 = sadd.s32 %s32, %s31
          %s256 = smul.addr %s255, 64
          %s257 = scalar_lea.hbm %s1, %s256
          %s259 = sshll.u32 %s251, 4
          %s260 = int_to_ptr.vmem [resolvable:$true] %s259
          %262 = dma.hbm_to_vmem [thread:$0]  %s257, 64, %s260, %s248
        $region32: #{tpu_custom_call.1} parent=23 // pred_fallthru
          _
      $region24: #{tpu_custom_call.1} parent=5 // pred_fallthru
        _
      %p263 = scmp.le.s32.totalorder 1, %s24
      %p264 = scmp.lt.s32.totalorder %s24, 3
      %p265 = pnand %p263, %p264
      %p266 = pneg %p265
      // Predicated region
      $region33: #{tpu_custom_call.1} parent=5 // pred_check
        _
      $region34: #{tpu_custom_call.1} parent=5 // pred_check_branch
        %268 = sbr.rel (%p265) target = $region36
      $region35: #{tpu_custom_call.1} parent=5 // pred_region
        %s269 = ssub.s32 %s24, 1
        %s270 = sand.u32 %s51, 1
        %s271 = scalar_lea.sflag [#allocation3], %s270
        %s272 = sand.u32 %s51, 1
        %s273 = smul.addr %s272, 4
        %s274 = scalar_lea.vmem [#allocation2], %s273
        // Predicated region
        $region37: #{tpu_custom_call.1} parent=35 // pred_check
          %p275 = pneg %p64
        $region38: #{tpu_custom_call.1} parent=35 // pred_check_branch
          %277 = sbr.rel (%p275) target = $region40
        $region39: #{tpu_custom_call.1} parent=35 // pred_region
          %278 = dma.done %s271, 64
        $region40: #{tpu_custom_call.1} parent=35 // pred_fallthru
          _
        %s279 = sand.u32 %s29, 1
        %s280 = scalar_lea.sflag [#allocation6], %s279
        %s281 = sand.u32 %s79, 1
        %s282 = smul.addr %s281, 4
        %s283 = scalar_lea.vmem [#allocation5], %s282
        // Predicated region
        $region41: #{tpu_custom_call.1} parent=35 // pred_check
          %p284 = pneg %p92
        $region42: #{tpu_custom_call.1} parent=35 // pred_check_branch
          %286 = sbr.rel (%p284) target = $region44
        $region43: #{tpu_custom_call.1} parent=35 // pred_region
          %287 = dma.done %s280, 64
        $region44: #{tpu_custom_call.1} parent=35 // pred_fallthru
          _
        // Predicated region
        $region45: #{tpu_custom_call.1} parent=35 // pred_check
          %p288 = pneg %p113
        $region46: #{tpu_custom_call.1} parent=35 // pred_check_branch
          %290 = sbr.rel (%p288) target = $region48
        $region47: #{tpu_custom_call.1} parent=35 // pred_region
          %291 = dma.done [#allocation6], 512
        $region48: #{tpu_custom_call.1} parent=35 // pred_fallthru
          _
        %s292 = sand.u32 %s51, 1
        %s293 = scalar_lea.sflag [#allocation3], %s292
        %s294 = sand.u32 %s51, 1
        %s295 = smul.addr %s294, 4
        %s296 = scalar_lea.vmem [#allocation2], %s295
        %p297 = pneg %p64
        %p298 = pneg %p61
        %s299 = sand.u32 %s29, 1
        %s300 = scalar_lea.sflag [#allocation6], %s299
        %s301 = sand.u32 %s79, 1
        %s302 = smul.addr %s301, 4
        %s303 = scalar_lea.vmem [#allocation5], %s302
        %p304 = pneg %p92
        %p305 = pneg %p89
        %p306 = pneg %p113
        %p307 = pneg %p110
        %p308 = pneg %p134
        %p309 = pneg %p131
        %p310 = pneg %p162
        %p311 = pneg %p159
        %s312 = sand.u32 %s149, 1
        %s313 = scalar_lea.sflag [#allocation4], %s312
        %s314 = sand.u32 %s149, 1
        %s315 = smul.addr %s314, 16
        %s316 = scalar_lea.vmem [#allocation8], %s315
        %p317 = pneg %p190
        %p318 = pneg %p187
        %s319 = sand.u32 %s177, 1
        %s320 = scalar_lea.sflag [#allocation10], %s319
        %s321 = sand.u32 %s177, 1
        %s322 = smul.addr %s321, 16
        %s323 = scalar_lea.vmem [#allocation9], %s322
        %v325 = vld [vmem:[%s274] sm:$0xf]
        %v326 = vld [vmem:[%s283] sm:$0xf]
        %v327 = vld [vmem:[#allocation7] sm:$0xf]
        %v328 = vld [vmem:[#allocation7 + $0x4] sm:$0xf]
        %v329 = vld [vmem:[#allocation7 + $0x8] sm:$0xf]
        %v330 = vld [vmem:[#allocation7 + $0xc] sm:$0xf]
        %v331 = vld [vmem:[%s3] sm:$0x1]
        %v333 = vlaneseq
        %v334 = vshrl.u32 %v333, 7
        %v335 = vsub.s32 0, %v334
        %v336 = vrot.slane %v331, %v335
        %v342 = vunpack.c.l.b16 %v327
        %v343 = vunpack.c.l.b16 %v328
        %v344 = vunpack.c.l.b16 %v329
        %v345 = vunpack.c.l.b16 %v330
        %v346 = vpack.c.b16 %v343, %v342
        %v347 = vpack.c.b16 %v345, %v344
        %vm350 = vcmask 261120
        %v352 = vsel %vm350, %v325, 0
        %354 = vmatprep.subr.bf16.mxu0 0
        %355 = vmatpush1.bf16.msra.mxu0 0
        %356 = vmatprep.subr.bf16.mxu0 0
        %357 = vmatpush1.bf16.msra.mxu0 0
        %358 = vmatprep.subr.bf16.mxu0 0
        %359 = vmatpush1.bf16.msra.mxu0 0
        %360 = vmatprep.subr.bf16.mxu0 0
        %361 = vmatpush1.bf16.msra.mxu0 0
        %362 = vmatprep.subr.bf16.mxu0 0
        %363 = vmatpush1.bf16.msra.mxu0 0
        %364 = vmatprep.subr.bf16.mxu0 0
        %365 = vmatpush1.bf16.msra.mxu0 0
        %366 = vmatprep.subr.bf16.mxu0 0
        %367 = vmatpush1.bf16.msra.mxu0 %v347
        %368 = vmatprep.subr.bf16.mxu0 0
        %369 = vmatpush1.bf16.msra.mxu0 %v346
        %370 = vmatprep.subr.bf16.mxu0 0
        %371 = vmatpush2.bf16.msra.mxu0 0
        %372 = vmatprep.subr.bf16.mxu0 0
        %373 = vmatpush2.bf16.msra.mxu0 0
        %374 = vmatprep.subr.bf16.mxu0 0
        %375 = vmatpush2.bf16.msra.mxu0 0
        %376 = vmatprep.subr.bf16.mxu0 0
        %377 = vmatpush2.bf16.msra.mxu0 0
        %378 = vmatprep.subr.bf16.mxu0 0
        %379 = vmatpush2.bf16.msra.mxu0 0
        %380 = vmatprep.subr.bf16.mxu0 0
        %381 = vmatpush2.bf16.msra.mxu0 0
        %382 = vmatprep.subr.bf16.mxu0 0
        %383 = vmatpush2.bf16.msra.mxu0 0
        %384 = vmatprep.subr.bf16.mxu0 0
        %385 = vmatpush2.bf16.msra.mxu0 0
        %386 = vmatprep.mubr.bf16.mxu0 0
        %387 = vmatmul.mubr.bf16.gmra.mxu0 %v352
        %v388 = vpop.f32.mrf.mxu0
        %v389 = vadd.f32 %v336, %v388
        %v390 = vpop.f32.mrf.mxu0
        %v391 = vpop.f32.mrf.mxu0
        %v392 = vpop.f32.mrf.mxu0
        %393 = vdwg.mxu0
        %s394 = scalar_lea.vmem [#allocation7], 16
        %v395 = vld [vmem:[%s394] sm:$0xf]
        %v396 = vld [vmem:[%s394 + $0x4] sm:$0xf]
        %v397 = vld [vmem:[%s394 + $0x8] sm:$0xf]
        %v398 = vld [vmem:[%s394 + $0xc] sm:$0xf]
        %s399 = scalar_lea.vmem %s3, 1
        %v400 = vld [vmem:[%s399] sm:$0x1]
        %v402 = vlaneseq
        %v403 = vshrl.u32 %v402, 7
        %v404 = vsub.s32 0, %v403
        %v405 = vrot.slane %v400, %v404
        %v411 = vunpack.c.l.b16 %v395
        %v412 = vunpack.c.l.b16 %v396
        %v413 = vunpack.c.l.b16 %v397
        %v414 = vunpack.c.l.b16 %v398
        %v415 = vpack.c.b16 %v412, %v411
        %v416 = vpack.c.b16 %v414, %v413
        %v420 = vsel %vm350, %v326, 0
        %422 = vmatprep.subr.bf16.mxu0 0
        %423 = vmatpush1.bf16.msra.mxu0 0
        %424 = vmatprep.subr.bf16.mxu0 0
        %425 = vmatpush1.bf16.msra.mxu0 0
        %426 = vmatprep.subr.bf16.mxu0 0
        %427 = vmatpush1.bf16.msra.mxu0 0
        %428 = vmatprep.subr.bf16.mxu0 0
        %429 = vmatpush1.bf16.msra.mxu0 0
        %430 = vmatprep.subr.bf16.mxu0 0
        %431 = vmatpush1.bf16.msra.mxu0 0
        %432 = vmatprep.subr.bf16.mxu0 0
        %433 = vmatpush1.bf16.msra.mxu0 0
        %434 = vmatprep.subr.bf16.mxu0 0
        %435 = vmatpush1.bf16.msra.mxu0 %v416
        %436 = vmatprep.subr.bf16.mxu0 0
        %437 = vmatpush1.bf16.msra.mxu0 %v415
        %438 = vmatprep.subr.bf16.mxu0 0
        %439 = vmatpush2.bf16.msra.mxu0 0
        %440 = vmatprep.subr.bf16.mxu0 0
        %441 = vmatpush2.bf16.msra.mxu0 0
        %442 = vmatprep.subr.bf16.mxu0 0
        %443 = vmatpush2.bf16.msra.mxu0 0
        %444 = vmatprep.subr.bf16.mxu0 0
        %445 = vmatpush2.bf16.msra.mxu0 0
        %446 = vmatprep.subr.bf16.mxu0 0
        %447 = vmatpush2.bf16.msra.mxu0 0
        %448 = vmatprep.subr.bf16.mxu0 0
        %449 = vmatpush2.bf16.msra.mxu0 0
        %450 = vmatprep.subr.bf16.mxu0 0
        %451 = vmatpush2.bf16.msra.mxu0 0
        %452 = vmatprep.subr.bf16.mxu0 0
        %453 = vmatpush2.bf16.msra.mxu0 0
        %454 = vmatprep.mubr.bf16.mxu0 0
        %455 = vmatmul.mubr.bf16.gmra.mxu0 %v420
        %v456 = vpop.f32.mrf.mxu0
        %v457 = vadd.f32 %v405, %v456
        %v458 = vpop.f32.mrf.mxu0
        %v459 = vpop.f32.mrf.mxu0
        %v460 = vpop.f32.mrf.mxu0
        %461 = vdwg.mxu0
        %v462 = vpack.c.bf16 %v389, %v389
        %vm463 = vcmask 60416
        %464 = vst.msk [vmem:[%s316] sm:$0xf] %vm463, %v462
        %v465 = vpack.c.bf16 %v457, %v457
        %466 = vst.msk [vmem:[%s323] sm:$0xf] %vm463, %v465
        %v468 = vunpack.c.l.b16 %v462
        %v469 = vpack.c.b16 %v468, %v468
        %470 = vrot.lane.b32.xlu0 %v469, 120
        %v471 = vpop.permute.xlu0 %470
        %s473 = scalar_lea.vmem %s316, 4 [#allocation8]
        %474 = vst.msk [vmem:[%s473] sm:$0xf] %vm463, %v471
        %v476 = vunpack.c.l.b16 %v465
        %v477 = vpack.c.b16 %v476, %v476
        %478 = vrot.lane.b32.xlu0 %v477, 120
        %v479 = vpop.permute.xlu0 %478
        %s481 = scalar_lea.vmem %s323, 4 [#allocation9]
        %482 = vst.msk [vmem:[%s481] sm:$0xf] %vm463, %v479
        %483 = vrot.lane.b32.xlu0 %v469, 112
        %v484 = vpop.permute.xlu0 %483
        %s486 = scalar_lea.vmem %s316, 8 [#allocation8]
        %487 = vst.msk [vmem:[%s486] sm:$0xf] %vm463, %v484
        %488 = vrot.lane.b32.xlu0 %v477, 112
        %v489 = vpop.permute.xlu0 %488
        %s491 = scalar_lea.vmem %s323, 8 [#allocation9]
        %492 = vst.msk [vmem:[%s491] sm:$0xf] %vm463, %v489
        %493 = vrot.lane.b32.xlu0 %v469, 104
        %v494 = vpop.permute.xlu0 %493
        %s496 = scalar_lea.vmem %s316, 12 [#allocation8]
        %497 = vst.msk [vmem:[%s496] sm:$0xf] %vm463, %v494
        %498 = vrot.lane.b32.xlu0 %v477, 104
        %v499 = vpop.permute.xlu0 %498
        %s501 = scalar_lea.vmem %s323, 12 [#allocation9]
        %502 = vst.msk [vmem:[%s501] sm:$0xf] %vm463, %v499
        %s503 = sand.u32 %s149, 1
        %s504 = scalar_lea.sflag [#allocation4], %s503
        %s505 = sand.u32 %s149, 1
        %s506 = smul.addr %s505, 16
        %s507 = scalar_lea.vmem [#allocation8], %s506
        %s508 = sand.u32 %s177, 1
        %s509 = scalar_lea.sflag [#allocation10], %s508
        %s510 = sand.u32 %s177, 1
        %s511 = smul.addr %s510, 16
        %s512 = scalar_lea.vmem [#allocation9], %s511
        // Predicated region
        $region49: #{tpu_custom_call.1} parent=35 // pred_check
          %p513 = pneg %p159
        $region50: #{tpu_custom_call.1} parent=35 // pred_check_branch
          %515 = sbr.rel (%p513) target = $region52
        $region51: #{tpu_custom_call.1} parent=35 // pred_region
          %s517 = ssub.s32 256, 256
          %518 = vsyncadd %s504, %s517
          %s519 = smul.addr %s33, 4
          %s520 = sadd.s32 %s34, %s519
          %s521 = smul.addr %s520, 64
          %s522 = scalar_lea.hbm %s4, %s521
          %s523 = sshll.u32 %s507, 4
          %s524 = int_to_ptr.vmem [resolvable:$true] %s523
          %529 = dma.vmem_to_hbm [thread:$0]  %s524, 256, %s522, %s504, 64, 64, 4
        $region52: #{tpu_custom_call.1} parent=35 // pred_fallthru
          _
        // Predicated region
        $region53: #{tpu_custom_call.1} parent=35 // pred_check
          %p530 = pneg %p187
        $region54: #{tpu_custom_call.1} parent=35 // pred_check_branch
          %532 = sbr.rel (%p530) target = $region56
        $region55: #{tpu_custom_call.1} parent=35 // pred_region
          %s534 = ssub.s32 256, 256
          %535 = vsyncadd %s509, %s534
          %s536 = smul.addr %s33, 4
          %s537 = sadd.s32 %s34, %s536
          %s538 = smul.addr %s537, 64
          %s539 = scalar_lea.hbm %s5, %s538
          %s540 = sshll.u32 %s512, 4
          %s541 = int_to_ptr.vmem [resolvable:$true] %s540
          %546 = dma.vmem_to_hbm [thread:$0]  %s541, 256, %s539, %s509, 64, 64, 4
        $region56: #{tpu_custom_call.1} parent=35 // pred_fallthru
          _
      $region36: #{tpu_custom_call.1} parent=5 // pred_fallthru
        _
      %p547 = scmp.le.s32.totalorder 2, %s24
      // Predicated region
      $region57: #{tpu_custom_call.1} parent=5 // pred_check
        %p548 = pneg %p547
      $region58: #{tpu_custom_call.1} parent=5 // pred_check_branch
        %550 = sbr.rel (%p548) target = $region60
      $region59: #{tpu_custom_call.1} parent=5 // pred_region
        %s551 = ssub.s32 %s24, 2
        // Predicated region
        $region61: #{tpu_custom_call.1} parent=59 // pred_check
          %p552 = pneg %p165
        $region62: #{tpu_custom_call.1} parent=59 // pred_check_branch
          %554 = sbr.rel (%p552) target = $region64
        $region63: #{tpu_custom_call.1} parent=59 // pred_region
          %s555 = sand.u32 %s150, 1
          %s556 = scalar_lea.sflag [#allocation4], %s555
          %s557 = sand.u32 %s150, 1
          %s558 = smul.addr %s557, 16
          %s559 = scalar_lea.vmem [#allocation8], %s558
          %560 = dma.done %s556, 256
        $region64: #{tpu_custom_call.1} parent=59 // pred_fallthru
          _
        // Predicated region
        $region65: #{tpu_custom_call.1} parent=59 // pred_check
          %p561 = pneg %p193
        $region66: #{tpu_custom_call.1} parent=59 // pred_check_branch
          %563 = sbr.rel (%p561) target = $region68
        $region67: #{tpu_custom_call.1} parent=59 // pred_region
          %s564 = sand.u32 %s178, 1
          %s565 = scalar_lea.sflag [#allocation10], %s564
          %s566 = sand.u32 %s178, 1
          %s567 = smul.addr %s566, 16
          %s568 = scalar_lea.vmem [#allocation9], %s567
          %569 = dma.done %s565, 256
        $region68: #{tpu_custom_call.1} parent=59 // pred_fallthru
          _
      $region60: #{tpu_custom_call.1} parent=5 // pred_fallthru
        _
    $region6: #{tpu_custom_call.1} parent=1 // loop_footer
      %s28 = sadd.s32 1, %s24
    $region7: #{tpu_custom_call.1} parent=1 // loop_footer_branch
      %23 = sbr.rel target = $region3
    $region8: #{tpu_custom_call.1} parent=1 // loop_exit
      _
    %570 = vsyncpa [#allocation3], 1
    %s571 = scalar_lea.sflag [#allocation3], 1
    %572 = vsyncpa %s571, 1
    %573 = vsyncpa [#allocation6], 1
    %s574 = scalar_lea.sflag [#allocation6], 1
    %575 = vsyncpa %s574, 1
    %576 = vsyncpa [#allocation4], 1
    %s577 = scalar_lea.sflag [#allocation4], 1
    %578 = vsyncpa %s577, 1
    %579 = vsyncpa [#allocation10], 1
    %s580 = scalar_lea.sflag [#allocation10], 1
    %581 = vsyncpa %s580, 1

</llo_original>
